<compile_context>
chip_gen: v7x
topology: tpu7x:2x2x1
jax: 0.10.0
libtpu: 0.0.40
codegen_flags: <defaults>
</compile_context>

<pallas_src>
import math

import jax
import jax.numpy as jnp
from jax.experimental import pallas as pl
from jax.experimental.pallas import tpu as pltpu

_LANES = 128
# 8192 rows * 128 lanes * 4 B = 4 MiB per f32 intermediate over one block.
_MAX_BLK_ROWS = 8192


def _cores_per_device():
    """Best-effort TensorCore count per device (multi-TC chips -> >1, else 1)."""
    try:
        dev = jax.devices()[0]
        for attr in ("num_cores", "core_count"):
            v = getattr(dev, attr, None)
            if isinstance(v, int) and v > 1:
                return v
    except Exception:
        pass
    return 1


def _make_kernel(blk_r, acc_rows, n_rows, steps_per_split, last_block, needs_mask):
    def _partial_sum(sq):
        if acc_rows == 1:
            return jnp.sum(sq, axis=0, keepdims=True)
        # Fold the block onto an (8, 128) footprint with pure vreg+vreg adds;
        # no per-step cross-sublane reduce.
        return sq.reshape(blk_r // acc_rows, acc_rows, _LANES).sum(axis=0)

    def kernel(yhat_ref, y_ref, out_ref, acc_ref):
        p = pl.program_id(0)
        r = pl.program_id(1)

        @pl.when(r == 0)
        def _init():
            acc_ref[...] = jnp.zeros_like(acc_ref)

        diff = yhat_ref[...].astype(jnp.float32) - y_ref[...].astype(jnp.float32)
        sq = diff * diff

        if needs_mask:
            block_idx = p * steps_per_split + r

            @pl.when(block_idx < last_block)
            def _bulk():
                # Hot path: no masking work at all.
                acc_ref[...] += _partial_sum(sq)

            @pl.when(block_idx >= last_block)
            def _edge():
                # Partial last block and (for the 2-way split with odd n_blocks)
                # the fully-masked overflow step.  The index_map clamps the DMA
                # to the last real block; the *unclamped* global row index makes
                # rows >= n_rows (including the whole overflow block) contribute 0.
                row0 = block_idx * blk_r
                row_idx = row0 + jax.lax.broadcasted_iota(jnp.int32, sq.shape, 0)
                acc_ref[...] += _partial_sum(
                    jnp.where(row_idx < n_rows, sq, jnp.float32(0.0)))
        else:
            acc_ref[...] += _partial_sum(sq)

        @pl.when(r == steps_per_split - 1)
        def _finalize():
            # Emit the lane-partial sums; the single cross-lane reduce + sqrt
            # happen once in the wrapper on a tiny array.
            out_ref[...] = acc_ref[...]

    return kernel


def _ssq_pallas(yhat2d, y2d):
    """Sum of squared differences over an (n_rows, 128) slab via Pallas."""
    n_rows = yhat2d.shape[0]
    itemsize = jnp.dtype(yhat2d.dtype).itemsize

    blk_r = n_rows if n_rows <= _MAX_BLK_ROWS else _MAX_BLK_ROWS
    acc_rows = 8 if blk_r % 8 == 0 else 1

    n_blocks = -(-n_rows // blk_r)                       # ceil
    n_splits = min(2 if _cores_per_device() > 1 else 1, n_blocks)
    steps_per_split = -(-n_blocks // n_splits)           # ceil
    total_blocks = n_splits * steps_per_split
    needs_mask = (total_blocks * blk_r) != n_rows
    last_block = n_blocks - 1

    def in_map(p, r):
        # Clamp so the (fully masked) overflow step never DMAs out of bounds.
        return (jnp.minimum(p * steps_per_split + r, last_block), 0)

    block_in_bytes = blk_r * _LANES * itemsize
    block_f32_bytes = blk_r * _LANES * 4
    # 2 inputs x 2 pipeline buffers + headroom for f32 elementwise
    # intermediates (diff, square, mask path) + accumulator/output slack.
    vmem_limit = int(min(
        48 * 1024 * 1024,
        max(16 * 1024 * 1024,
            4 * block_in_bytes + 5 * block_f32_bytes + 2 * 1024 * 1024),
    ))

    n_elems = n_rows * _LANES
    cost = pl.CostEstimate(
        flops=3 * n_elems,
        transcendentals=0,
        bytes_accessed=2 * n_elems * itemsize + acc_rows * n_splits * _LANES * 4,
    )

    partials = pl.pallas_call(
        _make_kernel(blk_r, acc_rows, n_rows, steps_per_split, last_block, needs_mask),
        out_shape=jax.ShapeDtypeStruct((acc_rows, n_splits * _LANES), jnp.float32),
        grid_spec=pltpu.PrefetchScalarGridSpec(
            num_scalar_prefetch=0,
            grid=(n_splits, steps_per_split),
            in_specs=[
                pl.BlockSpec((blk_r, _LANES), in_map),
                pl.BlockSpec((blk_r, _LANES), in_map),
            ],
            out_specs=pl.BlockSpec((acc_rows, _LANES), lambda p, r: (0, p)),
            scratch_shapes=[pltpu.VMEM((acc_rows, _LANES), jnp.float32)],
        ),
        # TODO(synk): if xprof on v7x shows the size-2 leading axis not landing
        # on both TensorCores, switch its semantics to pltpu.CORE_PARALLEL.
        compiler_params=pltpu.CompilerParams(
            dimension_semantics=("parallel", "arbitrary"),
            vmem_limit_bytes=vmem_limit,
        ),
        cost_estimate=cost,
    )(yhat2d, y2d)
    return jnp.sum(partials)


def root_mean_squared_error(yhat, y):
    assert yhat.shape == y.shape, "yhat and y must have the same shape"
    n_true = math.prod(yhat.shape) if yhat.shape else 1

    # Flatten in native dtype (metadata-only for contiguous inputs).
    flat_yhat = jnp.ravel(yhat)
    flat_y = jnp.ravel(y)

    n_main = (n_true // _LANES) * _LANES
    n_rows = n_main // _LANES

    if n_rows == 0:
        # Sub-128-element input: a kernel launch is not worthwhile.
        d = flat_yhat.astype(jnp.float32) - flat_y.astype(jnp.float32)
        return jnp.sqrt(jnp.sum(d * d) / jnp.float32(n_true))

    # For 128-aligned sizes (the common case) the slice is a no-op and the
    # reshape is free, so the kernel reads the original HBM buffers directly.
    yhat2d = flat_yhat[:n_main].reshape(n_rows, _LANES)
    y2d = flat_y[:n_main].reshape(n_rows, _LANES)
    ssq = _ssq_pallas(yhat2d, y2d)

    n_tail = n_true - n_main
    if n_tail > 0:
        dt = flat_yhat[n_main:].astype(jnp.float32) - flat_y[n_main:].astype(jnp.float32)
        ssq = ssq + jnp.sum(dt * dt)

    return jnp.sqrt(ssq / jnp.float32(n_true))


if __name__ == "__main__":
    key = jax.random.PRNGKey(0)
    k1, k2 = jax.random.split(key)
    # Small NCHW-style regression outputs.
    yhat = jax.random.normal(k1, (2, 4, 16, 16), dtype=jnp.float32)
    y = jax.random.normal(k2, (2, 4, 16, 16), dtype=jnp.float32)

    result = jax.block_until_ready(root_mean_squared_error(yhat, y))

    # Reference check (plain JAX).
    ref = jnp.sqrt(jnp.mean((yhat.astype(jnp.float32) - y.astype(jnp.float32)) ** 2))
    assert jnp.allclose(result, ref, rtol=1e-5, atol=1e-6), (result, ref)

    print("KERNEL_OK")
</pallas_src>

<mosaic_0001>
module attributes {stable_mosaic.version = 11 : i64} {
  func.func @kernel(%arg0: i32, %arg1: i32, %arg2: memref<16x128xf32, #tpu.memory_space<vmem>>, %arg3: memref<16x128xf32, #tpu.memory_space<vmem>>, %arg4: memref<8x128xf32, #tpu.memory_space<vmem>>, %arg5: memref<8x128xf32, #tpu.memory_space<vmem>>) attributes {dimension_semantics = [#tpu.dimension_semantics<parallel>, #tpu.dimension_semantics<arbitrary>], iteration_bounds = array<i64: 1, 1>, scalar_prefetch = 0 : i64, scratch_operands = 1 : i64, tpu.core_type = #tpu.core_type<tc>, window_params = [{transform_indices = @transform_0, window_bounds = array<i64: 16, 128>}, {transform_indices = @transform_1, window_bounds = array<i64: 16, 128>}, {transform_indices = @transform_2, window_bounds = array<i64: 8, 128>}]} {
    %c0_i32 = arith.constant 0 : i32
    %0 = arith.cmpi eq, %arg1, %c0_i32 : i32
    %1 = arith.extui %0 : i1 to i32
    %c0_i32_0 = arith.constant 0 : i32
    %2 = arith.cmpi ne, %1, %c0_i32_0 : i32
    scf.if %2 {
      %cst_10 = arith.constant 0.000000e+00 : f32
      %15 = vector.broadcast %cst_10 : f32 to vector<8x128xf32>
      %c0_11 = arith.constant 0 : index
      %c0_12 = arith.constant 0 : index
      %16 = vector.load %arg5[%c0_11, %c0_12] : memref<8x128xf32, #tpu.memory_space<vmem>>, vector<8x128xf32>
      tpu.vector_store %arg5[%c0_11, %c0_12], %15 {strides = array<i32>} : memref<8x128xf32, #tpu.memory_space<vmem>>, vector<8x128xf32>,
    } else {
    }
    %c0 = arith.constant 0 : index
    %c0_1 = arith.constant 0 : index
    %3 = vector.load %arg2[%c0, %c0_1] : memref<16x128xf32, #tpu.memory_space<vmem>>, vector<16x128xf32>
    %c0_2 = arith.constant 0 : index
    %c0_3 = arith.constant 0 : index
    %4 = vector.load %arg3[%c0_2, %c0_3] : memref<16x128xf32, #tpu.memory_space<vmem>>, vector<16x128xf32>
    %5 = arith.subf %3, %4 : vector<16x128xf32>
    %6 = arith.mulf %5, %5 : vector<16x128xf32>
    %c0_4 = arith.constant 0 : index
    %c0_5 = arith.constant 0 : index
    %7 = vector.load %arg5[%c0_4, %c0_5] : memref<8x128xf32, #tpu.memory_space<vmem>>, vector<8x128xf32>
    %8 = vector.shape_cast %6 : vector<16x128xf32> to vector<2x8x128xf32>
    %cst = arith.constant dense<0.000000e+00> : vector<8x128xf32>
    %9 = vector.multi_reduction <add>, %8, %cst [0] : vector<2x8x128xf32> to vector<8x128xf32>
    %10 = arith.addf %7, %9 : vector<8x128xf32>
    %c0_6 = arith.constant 0 : index
    %c0_7 = arith.constant 0 : index
    %11 = vector.load %arg5[%c0_6, %c0_7] : memref<8x128xf32, #tpu.memory_space<vmem>>, vector<8x128xf32>
    tpu.vector_store %arg5[%c0_6, %c0_7], %10 {strides = array<i32>} : memref<8x128xf32, #tpu.memory_space<vmem>>, vector<8x128xf32>,
    %c0_i32_8 = arith.constant 0 : i32
    %12 = arith.cmpi eq, %arg1, %c0_i32_8 : i32
    %13 = arith.extui %12 : i1 to i32
    %c0_i32_9 = arith.constant 0 : i32
    %14 = arith.cmpi ne, %13, %c0_i32_9 : i32
    scf.if %14 {
      %c0_10 = arith.constant 0 : index
      %c0_11 = arith.constant 0 : index
      %15 = vector.load %arg5[%c0_10, %c0_11] : memref<8x128xf32, #tpu.memory_space<vmem>>, vector<8x128xf32>
      %c0_12 = arith.constant 0 : index
      %c0_13 = arith.constant 0 : index
      %16 = vector.load %arg4[%c0_12, %c0_13] : memref<8x128xf32, #tpu.memory_space<vmem>>, vector<8x128xf32>
      tpu.vector_store %arg4[%c0_12, %c0_13], %15 {strides = array<i32>} : memref<8x128xf32, #tpu.memory_space<vmem>>, vector<8x128xf32>,
    } else {
    }
    return
  }
  func.func @transform_0(%arg0: i32, %arg1: i32) -> (i32, i32) {
    %c1_i32 = arith.constant 1 : i32
    %0 = arith.muli %arg0, %c1_i32 : i32
    %1 = arith.addi %0, %arg1 : i32
    %c0_i32 = arith.constant 0 : i32
    %2 = arith.minsi %1, %c0_i32 : i32
    %c0_i32_0 = arith.constant 0 : i32
    %c0_i32_1 = arith.constant 0 : i32
    return %2, %c0_i32_0 : i32, i32
  }
  func.func @transform_1(%arg0: i32, %arg1: i32) -> (i32, i32) {
    %c1_i32 = arith.constant 1 : i32
    %0 = arith.muli %arg0, %c1_i32 : i32
    %1 = arith.addi %0, %arg1 : i32
    %c0_i32 = arith.constant 0 : i32
    %2 = arith.minsi %1, %c0_i32 : i32
    %c0_i32_0 = arith.constant 0 : i32
    %c0_i32_1 = arith.constant 0 : i32
    return %2, %c0_i32_0 : i32, i32
  }
  func.func @transform_2(%arg0: i32, %arg1: i32) -> (i32, i32) {
    %c0_i32 = arith.constant 0 : i32
    %c0_i32_0 = arith.constant 0 : i32
    return %c0_i32, %arg0 : i32, i32
  }
}

</mosaic_0001>

<llo_original>
// kernel: tpu_custom_call.1
$region0: #{tpu_custom_call.1}
  #allocation0 [shape = 'u32[]', space=smem, size = 0x4, offset = 0x4, fixed_abs, tag = 'smem constant byte address 0x4 - core index']
  #allocation1 [shape = 'u32[144,128]{1,0:T(1,128)}', space=vmem, size = 0x12000, scoped, tag = 'internal scratch']
  #allocation2 [shape = 'f32[8,128]{1,0:T(8,128)}', space=vmem, size = 0x1000, scoped, tag = 'scratch operand']
  %s0 = inlined_call_operand.hbm [shape: f32[16,128], index: 0, kind: input, shape index: {}]
  %s1 = inlined_call_operand.hbm [shape: f32[16,128], index: 1, kind: input, shape index: {}]
  %s2 = inlined_call_operand.hbm [shape: f32[8,128], index: 2, kind: output, shape index: {}]
  %s3 = sld [smem:[#allocation0]]
  $region34: #{tpu_custom_call.1} parent=0
    _
  %s5 = ssub.s32 1, %s3
  %s6 = scalar_select 0, %s5, %s3
  $region1: #{tpu_custom_call.1} parent=0
    #allocation3 [shape = 'u8[8192]{0}', space=vmem, size = 0x2000, scoped, tag = 'input window, operand 0, single buffered']
    #allocation4 [shape = 's32[1]{0}', space=sflag, size = 0x4, scoped, tag = 'scoped memory for tpu_custom_call.1']
    #allocation5 [shape = 's32[1]{0}', space=sflag, size = 0x4, scoped, tag = 'scoped memory for tpu_custom_call.1']
    #allocation6 [shape = 'u8[8192]{0}', space=vmem, size = 0x2000, scoped, tag = 'input window, operand 1, single buffered']
    #allocation7 [shape = 's32[1]{0}', space=sflag, size = 0x4, scoped, tag = 'scoped memory for tpu_custom_call.1']
    #allocation8 [shape = 'u8[4096]{0}', space=vmem, size = 0x1000, scoped, tag = 'output window, operand 0, single buffered']
    %7 = vsyncpa [#allocation4], 0
    %8 = vsyncpa [#allocation7], 0
    %9 = vsyncpa [#allocation5], 0
    // Predicated region
    $region2: #{tpu_custom_call.1} parent=1 // pred_check
      _
    $region3: #{tpu_custom_call.1} parent=1 // pred_check_branch
      %11 = sbr.rel (0) target = $region5
    $region4: #{tpu_custom_call.1} parent=1 // pred_region
      %s12 = sadd.s32 0, 0
      %p13 = scmp.lt.s32.totalorder %s12, 0
      %s14 = scalar_select %p13, %s12, 0
      %s15 = smul.u32 2, %s14
      %s17 = ssub.s32 256, 256
      %18 = vsyncadd [#allocation4], %s17
      %s19 = smul.addr %s15, 128
      %s20 = scalar_lea.hbm %s0, %s19
      %s21 = sshll.u32 [#allocation3], 4
      %s22 = int_to_ptr.vmem [resolvable:$true] %s21
      %27 = dma.hbm_to_vmem [thread:$0]  %s20, 256, %s22, [#allocation4], 128, 128, 8
    $region5: #{tpu_custom_call.1} parent=1 // pred_fallthru
      _
    // Predicated region
    $region6: #{tpu_custom_call.1} parent=1 // pred_check
      _
    $region7: #{tpu_custom_call.1} parent=1 // pred_check_branch
      %29 = sbr.rel (0) target = $region9
    $region8: #{tpu_custom_call.1} parent=1 // pred_region
      %s30 = sadd.s32 0, 0
      %p31 = scmp.lt.s32.totalorder %s30, 0
      %s32 = scalar_select %p31, %s30, 0
      %s33 = smul.u32 2, %s32
      %s35 = ssub.s32 256, 256
      %36 = vsyncadd [#allocation7], %s35
      %s37 = smul.addr %s33, 128
      %s38 = scalar_lea.hbm %s1, %s37
      %s39 = sshll.u32 [#allocation6], 4
      %s40 = int_to_ptr.vmem [resolvable:$true] %s39
      %45 = dma.hbm_to_vmem [thread:$0]  %s38, 256, %s40, [#allocation7], 128, 128, 8
    $region9: #{tpu_custom_call.1} parent=1 // pred_fallthru
      _
    // Predicated region
    $region10: #{tpu_custom_call.1} parent=1 // pred_check
      _
    $region11: #{tpu_custom_call.1} parent=1 // pred_check_branch
      %47 = sbr.rel (0) target = $region13
    $region12: #{tpu_custom_call.1} parent=1 // pred_region
      %48 = dma.done [#allocation4], 256
    $region13: #{tpu_custom_call.1} parent=1 // pred_fallthru
      _
    // Predicated region
    $region14: #{tpu_custom_call.1} parent=1 // pred_check
      _
    $region15: #{tpu_custom_call.1} parent=1 // pred_check_branch
      %50 = sbr.rel (0) target = $region17
    $region16: #{tpu_custom_call.1} parent=1 // pred_region
      %51 = dma.done [#allocation7], 256
    $region17: #{tpu_custom_call.1} parent=1 // pred_fallthru
      _
    %s52 = sadd.s32 0, 0
    %p53 = scmp.lt.s32.totalorder %s52, 0
    %s54 = scalar_select %p53, %s52, 0
    %s55 = smul.u32 2, %s54
    %s56 = sadd.s32 0, 0
    %p57 = scmp.lt.s32.totalorder %s56, 0
    %s58 = scalar_select %p57, %s56, 0
    %s59 = smul.u32 2, %s58
    %p60 = scmp.eq.s32.totalorder 0, 0
    // Predicated region
    $region18: #{tpu_custom_call.1} parent=1 // pred_check
      %p61 = pneg %p60
    $region19: #{tpu_custom_call.1} parent=1 // pred_check_branch
      %63 = sbr.rel (%p61) target = $region21
    $region20: #{tpu_custom_call.1} parent=1 // pred_region
      %64 = vst [vmem:[#allocation2] sm:$0xff] 0.0
    $region21: #{tpu_custom_call.1} parent=1 // pred_fallthru
      _
    %v65 = vld [vmem:[#allocation3] sm:$0xff]
    %v66 = vld [vmem:[#allocation3 + $0x8] sm:$0xff]
    %v67 = vld [vmem:[#allocation6] sm:$0xff]
    %v68 = vld [vmem:[#allocation6 + $0x8] sm:$0xff]
    %v69 = vsub.f32 %v65, %v67
    %v70 = vsub.f32 %v66, %v68
    %v71 = vmul.f32 %v69, %v69
    %v72 = vmul.f32 %v70, %v70
    %v73 = vld [vmem:[#allocation2] sm:$0xff]
    %v74 = vadd.f32 %v71, %v72
    %v75 = vadd.f32 %v73, %v74
    %76 = vst [vmem:[#allocation2] sm:$0xff] %v75
    // Predicated region
    $region22: #{tpu_custom_call.1} parent=1 // pred_check
      %p77 = pneg %p60
    $region23: #{tpu_custom_call.1} parent=1 // pred_check_branch
      %79 = sbr.rel (%p77) target = $region25
    $region24: #{tpu_custom_call.1} parent=1 // pred_region
      %v80 = vld [vmem:[#allocation2] sm:$0xff]
      %81 = vst [vmem:[#allocation8] sm:$0xff] %v80
    $region25: #{tpu_custom_call.1} parent=1 // pred_fallthru
      _
    // Predicated region
    $region26: #{tpu_custom_call.1} parent=1 // pred_check
      _
    $region27: #{tpu_custom_call.1} parent=1 // pred_check_branch
      %83 = sbr.rel (0) target = $region29
    $region28: #{tpu_custom_call.1} parent=1 // pred_region
      %s85 = ssub.s32 128, 128
      %86 = vsyncadd [#allocation5], %s85
      %s88 = sshll.u32 [#allocation8], 4
      %s89 = int_to_ptr.vmem [resolvable:$true] %s88
      %91 = dma.vmem_to_hbm [thread:$0]  %s89, 128, %s2, [#allocation5]
    $region29: #{tpu_custom_call.1} parent=1 // pred_fallthru
      _
    // Predicated region
    $region30: #{tpu_custom_call.1} parent=1 // pred_check
      _
    $region31: #{tpu_custom_call.1} parent=1 // pred_check_branch
      %93 = sbr.rel (0) target = $region33
    $region32: #{tpu_custom_call.1} parent=1 // pred_region
      %94 = dma.done [#allocation5], 128
    $region33: #{tpu_custom_call.1} parent=1 // pred_fallthru
      _
    %95 = vsyncpa [#allocation4], 1
    %96 = vsyncpa [#allocation7], 1
    %97 = vsyncpa [#allocation5], 1

</llo_original>
